<compile_context>
chip_gen: v6e
topology: v6e:2x2x1
jax: 0.10.0
libtpu: 0.0.40
codegen_flags: <defaults>
</compile_context>

<pallas_src>
import functools

import jax
import jax.numpy as jnp
from jax import lax
from jax.experimental import pallas as pl
from jax.experimental.pallas import tpu as pltpu


def _conv_relu_kernel(w_ref, x_ref, o_ref, *, tap_offsets, chunk_len, apply_relu):
    """One grid step = one image.

    w_ref: (KH*KW, Cout, Cin) bf16  -- per-tap weight matrices (tiny, resident)
    x_ref: (1, Cin, Lin)      bf16  -- flattened zero-padded plane, row pitch Wp
    o_ref: (1, Cout, Ho*Wp)   f32   -- flattened output, same row pitch Wp
    """
    cout = o_ref.shape[1]
    x = x_ref[0]                                       # (Cin, Lin) bf16, load once
    acc = jnp.zeros((cout, chunk_len), jnp.float32)
    for t, off in enumerate(tap_offsets):              # unrolled at trace time
        w_tap = w_ref[t]                               # (Cout, Cin) bf16
        chunk = x[:, off:off + chunk_len]              # (Cin, Ho*Wp), static slice
        acc = acc + jnp.dot(w_tap, chunk, preferred_element_type=jnp.float32)
    if apply_relu:
        acc = jnp.maximum(acc, 0.0)                    # f32 epilogue on the VPU
    o_ref[0] = acc.astype(o_ref.dtype)


def basic_conv(x_nchw, weight, *, stride=1, padding=0, dilation=1, groups=1,
               relu=True, out_dtype=None):
    """Pallas implementation of BasicConv.forward: relu(conv2d(x)), bias=False."""
    # TODO(synk): groups > 1, bias, and stride > 1 are not implemented (the
    # module is used with groups=1, bias=False, stride=1 in TripletAttention).
    assert groups == 1
    assert stride == 1
    N, Cin, H, W = x_nchw.shape
    Cout, Cin_w, KH, KW = weight.shape
    assert Cin_w == Cin
    out_dtype = x_nchw.dtype if out_dtype is None else out_dtype

    Hp, Wp = H + 2 * padding, W + 2 * padding
    Ho = Hp - dilation * (KH - 1)
    Wo = Wp - dilation * (KW - 1)
    assert Ho > 0 and Wo > 0
    L = Ho * Wp                          # per-tap matmul width (flat, pitch Wp)

    # One extra zero row at the bottom keeps the last tap's chunk in-bounds
    # (the tail columns it produces are garbage and are sliced off afterwards).
    extra_rows = 1 if dilation * (KW - 1) > 0 else 0
    Lin = (Hp + extra_rows) * Wp

    # ---- wrapper glue (layout only): bf16 cast, one pad, free flatten -------
    xb = x_nchw.astype(jnp.bfloat16)
    xp = jnp.pad(xb, ((0, 0), (0, 0),
                      (padding, padding + extra_rows), (padding, padding)))
    xf = xp.reshape(N, Cin, Lin)                                  # contiguous, free
    w_taps = jnp.transpose(weight.astype(jnp.bfloat16), (2, 3, 0, 1))
    w_taps = w_taps.reshape(KH * KW, Cout, Cin)                   # tap t = kh*KW + kw

    tap_offsets = tuple(kh * dilation * Wp + kw * dilation
                        for kh in range(KH) for kw in range(KW))

    # Per-step VMEM footprint: double-buffered input/output blocks + weights.
    step_bytes = 2 * (Cin * Lin * 2 + Cout * L * 4) + KH * KW * Cout * Cin * 2
    # TODO(synk): tile Ho (second grid axis with haloed row windows) and Cout
    # (sublane blocks of 256) for very large spatial extents / channel counts.
    assert step_bytes < (16 << 20), "spatial plane too large for a single block"

    kernel = functools.partial(_conv_relu_kernel, tap_offsets=tap_offsets,
                               chunk_len=L, apply_relu=relu)
    y_flat = pl.pallas_call(
        kernel,
        out_shape=jax.ShapeDtypeStruct((N, Cout, L), out_dtype),
        grid_spec=pltpu.PrefetchScalarGridSpec(
            num_scalar_prefetch=0,
            grid=(N,),                                   # N>=2 -> both v7x TCs busy
            in_specs=[
                pl.BlockSpec((KH * KW, Cout, Cin), lambda n: (0, 0, 0)),
                pl.BlockSpec((1, Cin, Lin), lambda n: (n, 0, 0)),
            ],
            out_specs=pl.BlockSpec((1, Cout, L), lambda n: (n, 0, 0)),
        ),
        compiler_params=pltpu.CompilerParams(
            dimension_semantics=("parallel",),           # batch steps independent
            # vmem_limit_bytes intentionally left at the default: the real
            # double-buffered footprint is ~tens of KiB (see step_bytes).
        ),
    )(w_taps, xf)

    # Row pitch is Wp; the reshape is free (contiguous) and only a cheap,
    # output-sized column slice drops the (Wp - Wo) garbage columns.  The old
    # full NCHW transpose and the 9x patch materialization are both gone.
    return y_flat.reshape(N, Cout, Ho, Wp)[:, :, :, :Wo]


def _reference(x_nchw, weight, *, stride, padding, dilation, relu):
    y = lax.conv_general_dilated(
        x_nchw, weight,
        window_strides=(stride, stride),
        padding=((padding, padding), (padding, padding)),
        rhs_dilation=(dilation, dilation),
        dimension_numbers=("NCHW", "OIHW", "NCHW"),
    )
    if relu:
        y = jnp.maximum(y, 0.0)
    return y


if __name__ == "__main__":
    # BasicConv(in_planes=4, out_planes=8, kernel_size=3, stride=1, padding=1,
    #           relu=True, bias=False)
    N, Cin, H, W = 2, 4, 16, 16
    Cout, K = 8, 3
    stride, padding, dilation = 1, 1, 1

    key = jax.random.PRNGKey(0)
    kx, kw = jax.random.split(key)
    x = jax.random.normal(kx, (N, Cin, H, W), dtype=jnp.float32)

    # Deterministic Conv2d-style init: uniform with bound = 1/sqrt(fan_in)
    fan_in = Cin * K * K
    bound = 1.0 / (fan_in ** 0.5)
    weight = jax.random.uniform(
        kw, (Cout, Cin, K, K), dtype=jnp.float32, minval=-bound, maxval=bound)

    out = basic_conv(x, weight, stride=stride, padding=padding,
                     dilation=dilation, groups=1, relu=True)
    out = jax.block_until_ready(out)

    # Reference with the same bf16 operand rounding (conv itself in f32).
    x_q = x.astype(jnp.bfloat16).astype(jnp.float32)
    w_q = weight.astype(jnp.bfloat16).astype(jnp.float32)
    ref = _reference(x_q, w_q, stride=stride, padding=padding,
                     dilation=dilation, relu=True)

    assert out.shape == (N, Cout, H, W), out.shape
    max_err = float(jnp.max(jnp.abs(out - ref)))
    assert jnp.allclose(out, ref, atol=1e-2, rtol=1e-2), max_err

    print("KERNEL_OK")
</pallas_src>

<mosaic_0001>
module attributes {stable_mosaic.version = 11 : i64} {
  func.func @_conv_relu_kernel(%arg0: i32, %arg1: memref<9x8x4xbf16, #tpu.memory_space<vmem>>, %arg2: memref<1x4x342xbf16, #tpu.memory_space<vmem>>, %arg3: memref<1x8x288xf32, #tpu.memory_space<vmem>>) attributes {dimension_semantics = [#tpu.dimension_semantics<parallel>], iteration_bounds = array<i64: 2>, scalar_prefetch = 0 : i64, scratch_operands = 0 : i64, tpu.core_type = #tpu.core_type<tc>, window_params = [{pipeline_mode = #tpu.pipeline_mode<synchronous>, transform_indices = @transform_0, window_bounds = array<i64: 9, 8, 4>}, {transform_indices = @transform_1, window_bounds = array<i64: 1, 4, 342>}, {transform_indices = @transform_2, window_bounds = array<i64: 1, 8, 288>}]} {
    %c0 = arith.constant 0 : index
    %c0_0 = arith.constant 0 : index
    %c0_1 = arith.constant 0 : index
    %0 = vector.load %arg2[%c0, %c0_0, %c0_1] : memref<1x4x342xbf16, #tpu.memory_space<vmem>>, vector<1x4x342xbf16>
    %1 = vector.shape_cast %0 : vector<1x4x342xbf16> to vector<4x342xbf16>
    %cst = arith.constant 0.000000e+00 : f32
    %2 = vector.broadcast %cst : f32 to vector<8x288xf32>
    %c0_2 = arith.constant 0 : index
    %c0_3 = arith.constant 0 : index
    %c0_4 = arith.constant 0 : index
    %3 = vector.load %arg1[%c0_2, %c0_3, %c0_4] : memref<9x8x4xbf16, #tpu.memory_space<vmem>>, vector<1x8x4xbf16>
    %4 = vector.shape_cast %3 : vector<1x8x4xbf16> to vector<8x4xbf16>
    %5 = vector.extract_strided_slice %1 {offsets = [0, 0], sizes = [4, 288], strides = [1, 1]} : vector<4x342xbf16> to vector<4x288xbf16>
    %cst_5 = arith.constant dense<0.000000e+00> : vector<8x288xf32>
    %6 = tpu.matmul %4, %5, %cst_5 {dimension_numbers = #tpu.dot_dimension_numbers<[1], [0], [0], [1], [0, 0, 1, 1], [], []>} : vector<8x4xbf16>, vector<4x288xbf16>, vector<8x288xf32> -> vector<8x288xf32>
    %7 = arith.addf %2, %6 : vector<8x288xf32>
    %c1 = arith.constant 1 : index
    %c0_6 = arith.constant 0 : index
    %c0_7 = arith.constant 0 : index
    %8 = vector.load %arg1[%c1, %c0_6, %c0_7] : memref<9x8x4xbf16, #tpu.memory_space<vmem>>, vector<1x8x4xbf16>
    %9 = vector.shape_cast %8 : vector<1x8x4xbf16> to vector<8x4xbf16>
    %10 = vector.extract_strided_slice %1 {offsets = [0, 1], sizes = [4, 288], strides = [1, 1]} : vector<4x342xbf16> to vector<4x288xbf16>
    %cst_8 = arith.constant dense<0.000000e+00> : vector<8x288xf32>
    %11 = tpu.matmul %9, %10, %cst_8 {dimension_numbers = #tpu.dot_dimension_numbers<[1], [0], [0], [1], [0, 0, 1, 1], [], []>} : vector<8x4xbf16>, vector<4x288xbf16>, vector<8x288xf32> -> vector<8x288xf32>
    %12 = arith.addf %7, %11 : vector<8x288xf32>
    %c2 = arith.constant 2 : index
    %c0_9 = arith.constant 0 : index
    %c0_10 = arith.constant 0 : index
    %13 = vector.load %arg1[%c2, %c0_9, %c0_10] : memref<9x8x4xbf16, #tpu.memory_space<vmem>>, vector<1x8x4xbf16>
    %14 = vector.shape_cast %13 : vector<1x8x4xbf16> to vector<8x4xbf16>
    %15 = vector.extract_strided_slice %1 {offsets = [0, 2], sizes = [4, 288], strides = [1, 1]} : vector<4x342xbf16> to vector<4x288xbf16>
    %cst_11 = arith.constant dense<0.000000e+00> : vector<8x288xf32>
    %16 = tpu.matmul %14, %15, %cst_11 {dimension_numbers = #tpu.dot_dimension_numbers<[1], [0], [0], [1], [0, 0, 1, 1], [], []>} : vector<8x4xbf16>, vector<4x288xbf16>, vector<8x288xf32> -> vector<8x288xf32>
    %17 = arith.addf %12, %16 : vector<8x288xf32>
    %c3 = arith.constant 3 : index
    %c0_12 = arith.constant 0 : index
    %c0_13 = arith.constant 0 : index
    %18 = vector.load %arg1[%c3, %c0_12, %c0_13] : memref<9x8x4xbf16, #tpu.memory_space<vmem>>, vector<1x8x4xbf16>
    %19 = vector.shape_cast %18 : vector<1x8x4xbf16> to vector<8x4xbf16>
    %20 = vector.extract_strided_slice %1 {offsets = [0, 18], sizes = [4, 288], strides = [1, 1]} : vector<4x342xbf16> to vector<4x288xbf16>
    %cst_14 = arith.constant dense<0.000000e+00> : vector<8x288xf32>
    %21 = tpu.matmul %19, %20, %cst_14 {dimension_numbers = #tpu.dot_dimension_numbers<[1], [0], [0], [1], [0, 0, 1, 1], [], []>} : vector<8x4xbf16>, vector<4x288xbf16>, vector<8x288xf32> -> vector<8x288xf32>
    %22 = arith.addf %17, %21 : vector<8x288xf32>
    %c4 = arith.constant 4 : index
    %c0_15 = arith.constant 0 : index
    %c0_16 = arith.constant 0 : index
    %23 = vector.load %arg1[%c4, %c0_15, %c0_16] : memref<9x8x4xbf16, #tpu.memory_space<vmem>>, vector<1x8x4xbf16>
    %24 = vector.shape_cast %23 : vector<1x8x4xbf16> to vector<8x4xbf16>
    %25 = vector.extract_strided_slice %1 {offsets = [0, 19], sizes = [4, 288], strides = [1, 1]} : vector<4x342xbf16> to vector<4x288xbf16>
    %cst_17 = arith.constant dense<0.000000e+00> : vector<8x288xf32>
    %26 = tpu.matmul %24, %25, %cst_17 {dimension_numbers = #tpu.dot_dimension_numbers<[1], [0], [0], [1], [0, 0, 1, 1], [], []>} : vector<8x4xbf16>, vector<4x288xbf16>, vector<8x288xf32> -> vector<8x288xf32>
    %27 = arith.addf %22, %26 : vector<8x288xf32>
    %c5 = arith.constant 5 : index
    %c0_18 = arith.constant 0 : index
    %c0_19 = arith.constant 0 : index
    %28 = vector.load %arg1[%c5, %c0_18, %c0_19] : memref<9x8x4xbf16, #tpu.memory_space<vmem>>, vector<1x8x4xbf16>
    %29 = vector.shape_cast %28 : vector<1x8x4xbf16> to vector<8x4xbf16>
    %30 = vector.extract_strided_slice %1 {offsets = [0, 20], sizes = [4, 288], strides = [1, 1]} : vector<4x342xbf16> to vector<4x288xbf16>
    %cst_20 = arith.constant dense<0.000000e+00> : vector<8x288xf32>
    %31 = tpu.matmul %29, %30, %cst_20 {dimension_numbers = #tpu.dot_dimension_numbers<[1], [0], [0], [1], [0, 0, 1, 1], [], []>} : vector<8x4xbf16>, vector<4x288xbf16>, vector<8x288xf32> -> vector<8x288xf32>
    %32 = arith.addf %27, %31 : vector<8x288xf32>
    %c6 = arith.constant 6 : index
    %c0_21 = arith.constant 0 : index
    %c0_22 = arith.constant 0 : index
    %33 = vector.load %arg1[%c6, %c0_21, %c0_22] : memref<9x8x4xbf16, #tpu.memory_space<vmem>>, vector<1x8x4xbf16>
    %34 = vector.shape_cast %33 : vector<1x8x4xbf16> to vector<8x4xbf16>
    %35 = vector.extract_strided_slice %1 {offsets = [0, 36], sizes = [4, 288], strides = [1, 1]} : vector<4x342xbf16> to vector<4x288xbf16>
    %cst_23 = arith.constant dense<0.000000e+00> : vector<8x288xf32>
    %36 = tpu.matmul %34, %35, %cst_23 {dimension_numbers = #tpu.dot_dimension_numbers<[1], [0], [0], [1], [0, 0, 1, 1], [], []>} : vector<8x4xbf16>, vector<4x288xbf16>, vector<8x288xf32> -> vector<8x288xf32>
    %37 = arith.addf %32, %36 : vector<8x288xf32>
    %c7 = arith.constant 7 : index
    %c0_24 = arith.constant 0 : index
    %c0_25 = arith.constant 0 : index
    %38 = vector.load %arg1[%c7, %c0_24, %c0_25] : memref<9x8x4xbf16, #tpu.memory_space<vmem>>, vector<1x8x4xbf16>
    %39 = vector.shape_cast %38 : vector<1x8x4xbf16> to vector<8x4xbf16>
    %40 = vector.extract_strided_slice %1 {offsets = [0, 37], sizes = [4, 288], strides = [1, 1]} : vector<4x342xbf16> to vector<4x288xbf16>
    %cst_26 = arith.constant dense<0.000000e+00> : vector<8x288xf32>
    %41 = tpu.matmul %39, %40, %cst_26 {dimension_numbers = #tpu.dot_dimension_numbers<[1], [0], [0], [1], [0, 0, 1, 1], [], []>} : vector<8x4xbf16>, vector<4x288xbf16>, vector<8x288xf32> -> vector<8x288xf32>
    %42 = arith.addf %37, %41 : vector<8x288xf32>
    %c8 = arith.constant 8 : index
    %c0_27 = arith.constant 0 : index
    %c0_28 = arith.constant 0 : index
    %43 = vector.load %arg1[%c8, %c0_27, %c0_28] : memref<9x8x4xbf16, #tpu.memory_space<vmem>>, vector<1x8x4xbf16>
    %44 = vector.shape_cast %43 : vector<1x8x4xbf16> to vector<8x4xbf16>
    %45 = vector.extract_strided_slice %1 {offsets = [0, 38], sizes = [4, 288], strides = [1, 1]} : vector<4x342xbf16> to vector<4x288xbf16>
    %cst_29 = arith.constant dense<0.000000e+00> : vector<8x288xf32>
    %46 = tpu.matmul %44, %45, %cst_29 {dimension_numbers = #tpu.dot_dimension_numbers<[1], [0], [0], [1], [0, 0, 1, 1], [], []>} : vector<8x4xbf16>, vector<4x288xbf16>, vector<8x288xf32> -> vector<8x288xf32>
    %47 = arith.addf %42, %46 : vector<8x288xf32>
    %cst_30 = arith.constant 0.000000e+00 : f32
    %48 = vector.broadcast %cst_30 : f32 to vector<8x288xf32>
    %49 = arith.maximumf %47, %48 : vector<8x288xf32>
    %c0_31 = arith.constant 0 : index
    %c0_32 = arith.constant 0 : index
    %c0_33 = arith.constant 0 : index
    %50 = vector.load %arg3[%c0_31, %c0_32, %c0_33] : memref<1x8x288xf32, #tpu.memory_space<vmem>>, vector<1x8x288xf32>
    %51 = vector.shape_cast %50 : vector<1x8x288xf32> to vector<8x288xf32>
    %52 = vector.shape_cast %49 : vector<8x288xf32> to vector<1x8x288xf32>
    tpu.vector_store %arg3[%c0_31, %c0_32, %c0_33], %52 {strides = array<i32>} : memref<1x8x288xf32, #tpu.memory_space<vmem>>, vector<1x8x288xf32>,
    return
  }
  func.func @transform_0(%arg0: i32) -> (i32, i32, i32) {
    %c0_i32 = arith.constant 0 : i32
    %c0_i32_0 = arith.constant 0 : i32
    %c0_i32_1 = arith.constant 0 : i32
    %c0_i32_2 = arith.constant 0 : i32
    return %c0_i32, %c0_i32_0, %c0_i32_1 : i32, i32, i32
  }
  func.func @transform_1(%arg0: i32) -> (i32, i32, i32) {
    %c0_i32 = arith.constant 0 : i32
    %c0_i32_0 = arith.constant 0 : i32
    %c0_i32_1 = arith.constant 0 : i32
    return %arg0, %c0_i32, %c0_i32_0 : i32, i32, i32
  }
  func.func @transform_2(%arg0: i32) -> (i32, i32, i32) {
    %c0_i32 = arith.constant 0 : i32
    %c0_i32_0 = arith.constant 0 : i32
    %c0_i32_1 = arith.constant 0 : i32
    return %arg0, %c0_i32, %c0_i32_0 : i32, i32, i32
  }
}

</mosaic_0001>

<llo_original>
// kernel: tpu_custom_call.1
$region0: #{tpu_custom_call.1}
  #allocation0 [shape = 'u32[]', space=smem, size = 0x4, offset = 0x4, fixed_abs, tag = 'smem constant byte address 0x4 - core index']
  #allocation1 [shape = 'u32[144,128]{1,0:T(1,128)}', space=vmem, size = 0x12000, scoped, tag = 'internal scratch']
  %s0 = inlined_call_operand.vmem [shape: bf16[9,8,4], index: 0, kind: input, shape index: {}]
  %s1 = inlined_call_operand.vmem [shape: bf16[2,4,342], index: 1, kind: input, shape index: {}]
  %s2 = inlined_call_operand.hbm [shape: f32[2,8,288], index: 2, kind: output, shape index: {}]
  %s3 = sld [smem:[#allocation0]]
  $region41: #{tpu_custom_call.1} parent=0
    _
  %s5 = ssub.s32 1, %s3
  %s6 = scalar_select 0, %s5, %s3
  $region1: #{tpu_custom_call.1} parent=0
    #allocation2 [shape = 'u8[24576]{0}', space=vmem, size = 0x6000, scoped, tag = 'output window, operand 0']
    #allocation3 [shape = 's32[2]{0}', space=sflag, size = 0x8, scoped, tag = 'scoped memory for tpu_custom_call.1']
    %7 = vsyncpa [#allocation3], 0
    %s8 = scalar_lea.sflag [#allocation3], 1
    %9 = vsyncpa %s8, 0
    loop: start=0, step=1, limit=4
    $region2: #{tpu_custom_call.1} parent=1 // loop_pre_header
      _
    $region3: #{tpu_custom_call.1} parent=1 // loop_header
      %s11 = sphi 0, %s15
      %p12 = scmp.ge.s32.totalorder %s11, 4
      %s19 = sphi 0, %s19
      %s21 = sphi 0, %s19
      %s22 = sphi 0, %s21
      %s36 = sphi 0, %s22
      %s42 = sphi 0, %s44
      %s45 = sphi 0, %s42
      %s46 = sphi 0, %s45
      %s62 = sphi 0, %s46
      %s68 = sphi 0, %s70
      %s71 = sphi 0, %s68
      %s72 = sphi 0, %s71
      %s88 = sphi 0, %s72
    $region4: #{tpu_custom_call.1} parent=1 // loop_header_branch
      %14 = sbr.rel (%p12) target = $region8
    $region5: #{tpu_custom_call.1} parent=1 // loop_body
      %s16 = ssub.s32 %s11, 1
      %s17 = ssub.s32 %s11, 2
      %s18 = sadd.s32 %s11, 1
      %s20 = sadd.s32 %s19, 1
      %p23 = scmp.eq.s32.totalorder %s11, 1
      %p24 = scmp.ne.s32.totalorder %s19, %s21
      %p25 = scmp.eq.s32.totalorder %s11, 0
      %p26 = por %p24, %p25
      %p27 = scmp.ne.s32.totalorder %s19, %s21
      %p28 = scmp.eq.s32.totalorder %s16, 1
      %p29 = por %p27, %p28
      %p30 = scmp.ne.s32.totalorder %s21, %s22
      %p31 = scmp.eq.s32.totalorder %s16, 0
      %p32 = por %p30, %p31
      %p33 = scmp.ne.s32.totalorder %s21, %s22
      %p34 = scmp.eq.s32.totalorder %s17, 1
      %p35 = por %p33, %p34
      %p37 = scmp.ne.s32.totalorder %s22, %s36
      %p38 = scmp.eq.s32.totalorder %s17, 0
      %p39 = por %p37, %p38
      %s40 = ssub.s32 %s11, %s18
      %p41 = scmp.eq.s32.totalorder %s40, 0
      %s43 = sadd.s32 %s42, 1
      %s44 = scalar_select %p41, %s42, %s43
      %p47 = pneg %p41
      %p48 = scmp.eq.s32.totalorder %s11, 1
      %p49 = por %p47, %p48
      %p50 = scmp.ne.s32.totalorder %s42, %s45
      %p51 = scmp.eq.s32.totalorder %s11, 0
      %p52 = por %p50, %p51
      %p53 = scmp.ne.s32.totalorder %s42, %s45
      %p54 = scmp.eq.s32.totalorder %s16, 1
      %p55 = por %p53, %p54
      %p56 = scmp.ne.s32.totalorder %s45, %s46
      %p57 = scmp.eq.s32.totalorder %s16, 0
      %p58 = por %p56, %p57
      %p59 = scmp.ne.s32.totalorder %s45, %s46
      %p60 = scmp.eq.s32.totalorder %s17, 1
      %p61 = por %p59, %p60
      %p63 = scmp.ne.s32.totalorder %s46, %s62
      %p64 = scmp.eq.s32.totalorder %s17, 0
      %p65 = por %p63, %p64
      %s66 = ssub.s32 %s11, %s18
      %p67 = scmp.eq.s32.totalorder %s66, 0
      %s69 = sadd.s32 %s68, 1
      %s70 = scalar_select %p67, %s68, %s69
      %p73 = pneg %p67
      %p74 = scmp.eq.s32.totalorder %s11, 1
      %p75 = por %p73, %p74
      %p76 = scmp.ne.s32.totalorder %s68, %s71
      %p77 = scmp.eq.s32.totalorder %s11, 0
      %p78 = por %p76, %p77
      %p79 = scmp.ne.s32.totalorder %s68, %s71
      %p80 = scmp.eq.s32.totalorder %s16, 1
      %p81 = por %p79, %p80
      %p82 = scmp.ne.s32.totalorder %s71, %s72
      %p83 = scmp.eq.s32.totalorder %s16, 0
      %p84 = por %p82, %p83
      %p85 = scmp.ne.s32.totalorder %s71, %s72
      %p86 = scmp.eq.s32.totalorder %s17, 1
      %p87 = por %p85, %p86
      %p89 = scmp.ne.s32.totalorder %s72, %s88
      %p90 = scmp.eq.s32.totalorder %s17, 0
      %p91 = por %p89, %p90
      %p92 = scmp.le.s32.totalorder 1, %s11
      %p93 = scmp.lt.s32.totalorder %s11, 3
      %p94 = pnand %p92, %p93
      %p95 = pneg %p94
      // Predicated region
      $region9: #{tpu_custom_call.1} parent=5 // pred_check
        _
      $region10: #{tpu_custom_call.1} parent=5 // pred_check_branch
        %97 = sbr.rel (%p94) target = $region12
      $region11: #{tpu_custom_call.1} parent=5 // pred_region
        %s98 = ssub.s32 %s11, 1
        // Predicated region
        $region13: #{tpu_custom_call.1} parent=11 // pred_check
          %p99 = pneg %p32
        $region14: #{tpu_custom_call.1} parent=11 // pred_check_branch
          %101 = sbr.rel (%p99) target = $region16
        $region15: #{tpu_custom_call.1} parent=11 // pred_region
          _
        $region16: #{tpu_custom_call.1} parent=11 // pred_fallthru
          _
      $region12: #{tpu_custom_call.1} parent=5 // pred_fallthru
        _
      %p102 = scmp.lt.s32.totalorder %s11, 2
      // Predicated region
      $region17: #{tpu_custom_call.1} parent=5 // pred_check
        %p103 = pneg %p102
      $region18: #{tpu_custom_call.1} parent=5 // pred_check_branch
        %105 = sbr.rel (%p103) target = $region20
      $region19: #{tpu_custom_call.1} parent=5 // pred_region
        // Predicated region
        $region21: #{tpu_custom_call.1} parent=19 // pred_check
          %p106 = pneg %p52
        $region22: #{tpu_custom_call.1} parent=19 // pred_check_branch
          %108 = sbr.rel (%p106) target = $region24
        $region23: #{tpu_custom_call.1} parent=19 // pred_region
          %p109 = scmp.lt.s32.totalorder %s11, 1
          %s110 = scalar_select %p109, %s11, 1
          %s111 = smul.addr %s110, 3
          %s112 = smul.addr %s111, 2
          %s113 = scalar_lea.vmem %s1, %s112
        $region24: #{tpu_custom_call.1} parent=19 // pred_fallthru
          _
      $region20: #{tpu_custom_call.1} parent=5 // pred_fallthru
        _
      %p114 = scmp.le.s32.totalorder 1, %s11
      %p115 = scmp.lt.s32.totalorder %s11, 3
      %p116 = pnand %p114, %p115
      %p117 = pneg %p116
      // Predicated region
      $region25: #{tpu_custom_call.1} parent=5 // pred_check
        _
      $region26: #{tpu_custom_call.1} parent=5 // pred_check_branch
        %119 = sbr.rel (%p116) target = $region28
      $region27: #{tpu_custom_call.1} parent=5 // pred_region
        %s120 = ssub.s32 %s11, 1
        %p121 = pneg %p32
        %p122 = pneg %p29
        %p123 = scmp.lt.s32.totalorder %s16, 1
        %s124 = scalar_select %p123, %s16, 1
        %s125 = smul.addr %s124, 3
        %s126 = smul.addr %s125, 2
        %s127 = scalar_lea.vmem %s1, %s126
        %p128 = pneg %p58
        %p129 = pneg %p55
        %p130 = pneg %p84
        %p131 = pneg %p81
        %s132 = sand.u32 %s71, 1
        %s133 = scalar_lea.sflag [#allocation3], %s132
        %s134 = sand.u32 %s71, 1
        %s135 = smul.addr %s134, 24
        %s136 = scalar_lea.vmem [#allocation2], %s135
        %p137 = scmp.lt.s32.totalorder %s16, 1
        %s138 = scalar_select %p137, %s16, 1
        %s139 = smul.addr %s138, 3
        %s140 = smul.addr %s139, 2
        %s141 = scalar_lea.vmem %s1, %s140
        %v143 = vld [vmem:[%s141] sm:$0x3f]
        %v144 = vld [vmem:[%s0] sm:$0xf]
        %s145 = scalar_lea.vmem %s0, 4
        %v146 = vld [vmem:[%s145] sm:$0xf]
        %v148 = vcombine.high %v143, %v143
        %v150 = vunpack.c.l.s4 1983009808
        %v151 = vunpack.c.0.s8 %v150
        %v152 = vlaneseq
        %v153 = vshrl.u32 %v152, 7
        %v154 = vsub.s32 %v151, %v153
        %v155 = vrot.slane %v143, %v154
        %v157 = vunpack.c.l.s4 1983009808
        %v158 = vunpack.c.0.s8 %v157
        %v159 = vlaneseq
        %v160 = vshrl.u32 %v159, 7
        %v161 = vsub.s32 %v158, %v160
        %v162 = vrot.slane %v148, %v161
        %v163 = vcombine.high %v155, %v155
        %164 = vrot.lane.b32.xlu0 %v155, 127
        %v165 = vpop.permute.xlu0 %164
        %166 = vrot.lane.b32.xlu0 %v163, 127
        %v167 = vpop.permute.xlu0 %166
        %168 = vrot.lane.b32.xlu0 %v162, 127
        %v169 = vpop.permute.xlu0 %168
        %vm170 = vcmask 1039360
        %v171 = vsel %vm170, %v165, %v167
        %v172 = vsel %vm170, %v167, %v169
        %vm173 = vcmask 31744
        %v175 = vsel %vm173, %v146, 0
        %vm177 = vcmask 1041408
        %v179 = vsel %vm177, %v171, 0
        %v182 = vsel %vm177, %v172, 0
        %v185 = vsel %vm177, %v169, 0
        %187 = vmatprep.subr.bf16.mxu0 0
        %188 = vmatpush1.bf16.msra.mxu0 0
        %189 = vmatprep.subr.bf16.mxu0 0
        %190 = vmatpush1.bf16.msra.mxu0 0
        %191 = vmatprep.subr.bf16.mxu0 0
        %192 = vmatpush1.bf16.msra.mxu0 0
        %193 = vmatprep.subr.bf16.mxu0 0
        %194 = vmatpush1.bf16.msra.mxu0 0
        %195 = vmatprep.subr.bf16.mxu0 0
        %196 = vmatpush1.bf16.msra.mxu0 0
        %197 = vmatprep.subr.bf16.mxu0 0
        %198 = vmatpush1.bf16.msra.mxu0 0
        %199 = vmatprep.subr.bf16.mxu0 0
        %200 = vmatpush1.bf16.msra.mxu0 0
        %201 = vmatprep.subr.bf16.mxu0 %v182
        %202 = vmatpush1.bf16.msra.mxu0 %v179
        %203 = vmatprep.subr.bf16.mxu0 0
        %204 = vmatpush2.bf16.msra.mxu0 0
        %205 = vmatprep.subr.bf16.mxu0 0
        %206 = vmatpush2.bf16.msra.mxu0 0
        %207 = vmatprep.subr.bf16.mxu0 0
        %208 = vmatpush2.bf16.msra.mxu0 0
        %209 = vmatprep.subr.bf16.mxu0 0
        %210 = vmatpush2.bf16.msra.mxu0 0
        %211 = vmatprep.subr.bf16.mxu0 0
        %212 = vmatpush2.bf16.msra.mxu0 0
        %213 = vmatprep.subr.bf16.mxu0 0
        %214 = vmatpush2.bf16.msra.mxu0 0
        %215 = vmatprep.subr.bf16.mxu0 0
        %216 = vmatpush2.bf16.msra.mxu0 0
        %217 = vmatprep.subr.bf16.mxu0 0
        %218 = vmatpush2.bf16.msra.mxu0 0
        %219 = vmatprep.mubr.bf16.mxu0 0
        %220 = vmatmul.mubr.bf16.gmra.mxu0 %v175
        %v221 = vpop.f32.mrf.mxu0
        %v222 = vadd.f32 0.0, %v221
        %v223 = vpop.f32.mrf.mxu0
        %v224 = vadd.f32 0.0, %v223
        %v225 = vpop.f32.mrf.mxu0
        %v226 = vpop.f32.mrf.mxu0
        %227 = vdwg.mxu0
        %228 = vmatprep.subr.bf16.mxu0 0
        %229 = vmatpush1.bf16.msra.mxu0 0
        %230 = vmatprep.subr.bf16.mxu0 0
        %231 = vmatpush1.bf16.msra.mxu0 0
        %232 = vmatprep.subr.bf16.mxu0 0
        %233 = vmatpush1.bf16.msra.mxu0 0
        %234 = vmatprep.subr.bf16.mxu0 0
        %235 = vmatpush1.bf16.msra.mxu0 0
        %236 = vmatprep.subr.bf16.mxu0 0
        %237 = vmatpush1.bf16.msra.mxu0 0
        %238 = vmatprep.subr.bf16.mxu0 0
        %239 = vmatpush1.bf16.msra.mxu0 0
        %240 = vmatprep.subr.bf16.mxu0 0
        %241 = vmatpush1.bf16.msra.mxu0 0
        %242 = vmatprep.subr.bf16.mxu0 0
        %243 = vmatpush1.bf16.msra.mxu0 %v185
        %244 = vmatprep.subr.bf16.mxu0 0
        %245 = vmatpush2.bf16.msra.mxu0 0
        %246 = vmatprep.subr.bf16.mxu0 0
        %247 = vmatpush2.bf16.msra.mxu0 0
        %248 = vmatprep.subr.bf16.mxu0 0
        %249 = vmatpush2.bf16.msra.mxu0 0
        %250 = vmatprep.subr.bf16.mxu0 0
        %251 = vmatpush2.bf16.msra.mxu0 0
        %252 = vmatprep.subr.bf16.mxu0 0
        %253 = vmatpush2.bf16.msra.mxu0 0
        %254 = vmatprep.subr.bf16.mxu0 0
        %255 = vmatpush2.bf16.msra.mxu0 0
        %256 = vmatprep.subr.bf16.mxu0 0
        %257 = vmatpush2.bf16.msra.mxu0 0
        %258 = vmatprep.subr.bf16.mxu0 0
        %259 = vmatpush2.bf16.msra.mxu0 0
        %260 = vmatprep.mubr.bf16.mxu0 0
        %261 = vmatmul.mubr.bf16.gmra.mxu0 %v175
        %v262 = vpop.f32.mrf.mxu0
        %v263 = vadd.f32 0.0, %v262
        %v264 = vpop.f32.mrf.mxu0
        %v265 = vpop.f32.mrf.mxu0
        %v266 = vpop.f32.mrf.mxu0
        %267 = vdwg.mxu0
        %v269 = vsel %vm173, %v144, 0
        %v272 = vsel %vm177, %v155, 0
        %v275 = vsel %vm177, %v163, 0
        %v278 = vsel %vm177, %v162, 0
        %280 = vmatprep.subr.bf16.mxu0 0
        %281 = vmatpush1.bf16.msra.mxu0 0
        %282 = vmatprep.subr.bf16.mxu0 0
        %283 = vmatpush1.bf16.msra.mxu0 0
        %284 = vmatprep.subr.bf16.mxu0 0
        %285 = vmatpush1.bf16.msra.mxu0 0
        %286 = vmatprep.subr.bf16.mxu0 0
        %287 = vmatpush1.bf16.msra.mxu0 0
        %288 = vmatprep.subr.bf16.mxu0 0
        %289 = vmatpush1.bf16.msra.mxu0 0
        %290 = vmatprep.subr.bf16.mxu0 0
        %291 = vmatpush1.bf16.msra.mxu0 0
        %292 = vmatprep.subr.bf16.mxu0 0
        %293 = vmatpush1.bf16.msra.mxu0 0
        %294 = vmatprep.subr.bf16.mxu0 %v275
        %295 = vmatpush1.bf16.msra.mxu0 %v272
        %296 = vmatprep.subr.bf16.mxu0 0
        %297 = vmatpush2.bf16.msra.mxu0 0
        %298 = vmatprep.subr.bf16.mxu0 0
        %299 = vmatpush2.bf16.msra.mxu0 0
        %300 = vmatprep.subr.bf16.mxu0 0
        %301 = vmatpush2.bf16.msra.mxu0 0
        %302 = vmatprep.subr.bf16.mxu0 0
        %303 = vmatpush2.bf16.msra.mxu0 0
        %304 = vmatprep.subr.bf16.mxu0 0
        %305 = vmatpush2.bf16.msra.mxu0 0
        %306 = vmatprep.subr.bf16.mxu0 0
        %307 = vmatpush2.bf16.msra.mxu0 0
        %308 = vmatprep.subr.bf16.mxu0 0
        %309 = vmatpush2.bf16.msra.mxu0 0
        %310 = vmatprep.subr.bf16.mxu0 0
        %311 = vmatpush2.bf16.msra.mxu0 0
        %312 = vmatprep.mubr.bf16.mxu0 0
        %313 = vmatmul.mubr.bf16.gmra.mxu0 %v269
        %v314 = vpop.f32.mrf.mxu0
        %v315 = vadd.f32 %v222, %v314
        %v316 = vpop.f32.mrf.mxu0
        %v317 = vadd.f32 %v224, %v316
        %v318 = vpop.f32.mrf.mxu0
        %v319 = vpop.f32.mrf.mxu0
        %320 = vdwg.mxu0
        %321 = vmatprep.subr.bf16.mxu0 0
        %322 = vmatpush1.bf16.msra.mxu0 0
        %323 = vmatprep.subr.bf16.mxu0 0
        %324 = vmatpush1.bf16.msra.mxu0 0
        %325 = vmatprep.subr.bf16.mxu0 0
        %326 = vmatpush1.bf16.msra.mxu0 0
        %327 = vmatprep.subr.bf16.mxu0 0
        %328 = vmatpush1.bf16.msra.mxu0 0
        %329 = vmatprep.subr.bf16.mxu0 0
        %330 = vmatpush1.bf16.msra.mxu0 0
        %331 = vmatprep.subr.bf16.mxu0 0
        %332 = vmatpush1.bf16.msra.mxu0 0
        %333 = vmatprep.subr.bf16.mxu0 0
        %334 = vmatpush1.bf16.msra.mxu0 0
        %335 = vmatprep.subr.bf16.mxu0 0
        %336 = vmatpush1.bf16.msra.mxu0 %v278
        %337 = vmatprep.subr.bf16.mxu0 0
        %338 = vmatpush2.bf16.msra.mxu0 0
        %339 = vmatprep.subr.bf16.mxu0 0
        %340 = vmatpush2.bf16.msra.mxu0 0
        %341 = vmatprep.subr.bf16.mxu0 0
        %342 = vmatpush2.bf16.msra.mxu0 0
        %343 = vmatprep.subr.bf16.mxu0 0
        %344 = vmatpush2.bf16.msra.mxu0 0
        %345 = vmatprep.subr.bf16.mxu0 0
        %346 = vmatpush2.bf16.msra.mxu0 0
        %347 = vmatprep.subr.bf16.mxu0 0
        %348 = vmatpush2.bf16.msra.mxu0 0
        %349 = vmatprep.subr.bf16.mxu0 0
        %350 = vmatpush2.bf16.msra.mxu0 0
        %351 = vmatprep.subr.bf16.mxu0 0
        %352 = vmatpush2.bf16.msra.mxu0 0
        %353 = vmatprep.mubr.bf16.mxu0 0
        %354 = vmatmul.mubr.bf16.gmra.mxu0 %v269
        %v355 = vpop.f32.mrf.mxu0
        %v356 = vadd.f32 %v263, %v355
        %v357 = vpop.f32.mrf.mxu0
        %v358 = vpop.f32.mrf.mxu0
        %v359 = vpop.f32.mrf.mxu0
        %360 = vdwg.mxu0
        %s361 = scalar_lea.vmem %s0, 8
        %v362 = vld [vmem:[%s361] sm:$0xf]
        %363 = vrot.lane.b32.xlu0 %v155, 126
        %v364 = vpop.permute.xlu0 %363
        %365 = vrot.lane.b32.xlu0 %v163, 126
        %v366 = vpop.permute.xlu0 %365
        %367 = vrot.lane.b32.xlu0 %v162, 126
        %v368 = vpop.permute.xlu0 %367
        %vm369 = vcmask 1031168
        %v370 = vsel %vm369, %v364, %v366
        %v371 = vsel %vm369, %v366, %v368
        %v373 = vsel %vm173, %v362, 0
        %v376 = vsel %vm177, %v370, 0
        %v379 = vsel %vm177, %v371, 0
        %v382 = vsel %vm177, %v368, 0
        %384 = vmatprep.subr.bf16.mxu0 0
        %385 = vmatpush1.bf16.msra.mxu0 0
        %386 = vmatprep.subr.bf16.mxu0 0
        %387 = vmatpush1.bf16.msra.mxu0 0
        %388 = vmatprep.subr.bf16.mxu0 0
        %389 = vmatpush1.bf16.msra.mxu0 0
        %390 = vmatprep.subr.bf16.mxu0 0
        %391 = vmatpush1.bf16.msra.mxu0 0
        %392 = vmatprep.subr.bf16.mxu0 0
        %393 = vmatpush1.bf16.msra.mxu0 0
        %394 = vmatprep.subr.bf16.mxu0 0
        %395 = vmatpush1.bf16.msra.mxu0 0
        %396 = vmatprep.subr.bf16.mxu0 0
        %397 = vmatpush1.bf16.msra.mxu0 0
        %398 = vmatprep.subr.bf16.mxu0 %v379
        %399 = vmatpush1.bf16.msra.mxu0 %v376
        %400 = vmatprep.subr.bf16.mxu0 0
        %401 = vmatpush2.bf16.msra.mxu0 0
        %402 = vmatprep.subr.bf16.mxu0 0
        %403 = vmatpush2.bf16.msra.mxu0 0
        %404 = vmatprep.subr.bf16.mxu0 0
        %405 = vmatpush2.bf16.msra.mxu0 0
        %406 = vmatprep.subr.bf16.mxu0 0
        %407 = vmatpush2.bf16.msra.mxu0 0
        %408 = vmatprep.subr.bf16.mxu0 0
        %409 = vmatpush2.bf16.msra.mxu0 0
        %410 = vmatprep.subr.bf16.mxu0 0
        %411 = vmatpush2.bf16.msra.mxu0 0
        %412 = vmatprep.subr.bf16.mxu0 0
        %413 = vmatpush2.bf16.msra.mxu0 0
        %414 = vmatprep.subr.bf16.mxu0 0
        %415 = vmatpush2.bf16.msra.mxu0 0
        %416 = vmatprep.mubr.bf16.mxu0 0
        %417 = vmatmul.mubr.bf16.gmra.mxu0 %v373
        %v418 = vpop.f32.mrf.mxu0
        %v419 = vadd.f32 0.0, %v418
        %v420 = vpop.f32.mrf.mxu0
        %v421 = vadd.f32 0.0, %v420
        %v422 = vpop.f32.mrf.mxu0
        %v423 = vpop.f32.mrf.mxu0
        %424 = vdwg.mxu0
        %425 = vmatprep.subr.bf16.mxu0 0
        %426 = vmatpush1.bf16.msra.mxu0 0
        %427 = vmatprep.subr.bf16.mxu0 0
        %428 = vmatpush1.bf16.msra.mxu0 0
        %429 = vmatprep.subr.bf16.mxu0 0
        %430 = vmatpush1.bf16.msra.mxu0 0
        %431 = vmatprep.subr.bf16.mxu0 0
        %432 = vmatpush1.bf16.msra.mxu0 0
        %433 = vmatprep.subr.bf16.mxu0 0
        %434 = vmatpush1.bf16.msra.mxu0 0
        %435 = vmatprep.subr.bf16.mxu0 0
        %436 = vmatpush1.bf16.msra.mxu0 0
        %437 = vmatprep.subr.bf16.mxu0 0
        %438 = vmatpush1.bf16.msra.mxu0 0
        %439 = vmatprep.subr.bf16.mxu0 0
        %440 = vmatpush1.bf16.msra.mxu0 %v382
        %441 = vmatprep.subr.bf16.mxu0 0
        %442 = vmatpush2.bf16.msra.mxu0 0
        %443 = vmatprep.subr.bf16.mxu0 0
        %444 = vmatpush2.bf16.msra.mxu0 0
        %445 = vmatprep.subr.bf16.mxu0 0
        %446 = vmatpush2.bf16.msra.mxu0 0
        %447 = vmatprep.subr.bf16.mxu0 0
        %448 = vmatpush2.bf16.msra.mxu0 0
        %449 = vmatprep.subr.bf16.mxu0 0
        %450 = vmatpush2.bf16.msra.mxu0 0
        %451 = vmatprep.subr.bf16.mxu0 0
        %452 = vmatpush2.bf16.msra.mxu0 0
        %453 = vmatprep.subr.bf16.mxu0 0
        %454 = vmatpush2.bf16.msra.mxu0 0
        %455 = vmatprep.subr.bf16.mxu0 0
        %456 = vmatpush2.bf16.msra.mxu0 0
        %457 = vmatprep.mubr.bf16.mxu0 0
        %458 = vmatmul.mubr.bf16.gmra.mxu0 %v373
        %v459 = vpop.f32.mrf.mxu0
        %v460 = vadd.f32 0.0, %v459
        %v461 = vpop.f32.mrf.mxu0
        %v462 = vpop.f32.mrf.mxu0
        %v463 = vpop.f32.mrf.mxu0
        %464 = vdwg.mxu0
        %v465 = vadd.f32 %v315, %v419
        %v466 = vadd.f32 %v317, %v421
        %v467 = vadd.f32 %v356, %v460
        %s468 = scalar_lea.vmem %s0, 12
        %v469 = vld [vmem:[%s468] sm:$0xf]
        %470 = vrot.lane.b32.xlu0 %v155, 110
        %v471 = vpop.permute.xlu0 %470
        %472 = vrot.lane.b32.xlu0 %v163, 110
        %v473 = vpop.permute.xlu0 %472
        %474 = vrot.lane.b32.xlu0 %v162, 110
        %v475 = vpop.permute.xlu0 %474
        %vm476 = vcmask 900096
        %v477 = vsel %vm476, %v471, %v473
        %v478 = vsel %vm476, %v473, %v475
        %v480 = vsel %vm173, %v469, 0
        %v483 = vsel %vm177, %v477, 0
        %v486 = vsel %vm177, %v478, 0
        %v489 = vsel %vm177, %v475, 0
        %491 = vmatprep.subr.bf16.mxu0 0
        %492 = vmatpush1.bf16.msra.mxu0 0
        %493 = vmatprep.subr.bf16.mxu0 0
        %494 = vmatpush1.bf16.msra.mxu0 0
        %495 = vmatprep.subr.bf16.mxu0 0
        %496 = vmatpush1.bf16.msra.mxu0 0
        %497 = vmatprep.subr.bf16.mxu0 0
        %498 = vmatpush1.bf16.msra.mxu0 0
        %499 = vmatprep.subr.bf16.mxu0 0
        %500 = vmatpush1.bf16.msra.mxu0 0
        %501 = vmatprep.subr.bf16.mxu0 0
        %502 = vmatpush1.bf16.msra.mxu0 0
        %503 = vmatprep.subr.bf16.mxu0 0
        %504 = vmatpush1.bf16.msra.mxu0 0
        %505 = vmatprep.subr.bf16.mxu0 %v486
        %506 = vmatpush1.bf16.msra.mxu0 %v483
        %507 = vmatprep.subr.bf16.mxu0 0
        %508 = vmatpush2.bf16.msra.mxu0 0
        %509 = vmatprep.subr.bf16.mxu0 0
        %510 = vmatpush2.bf16.msra.mxu0 0
        %511 = vmatprep.subr.bf16.mxu0 0
        %512 = vmatpush2.bf16.msra.mxu0 0
        %513 = vmatprep.subr.bf16.mxu0 0
        %514 = vmatpush2.bf16.msra.mxu0 0
        %515 = vmatprep.subr.bf16.mxu0 0
        %516 = vmatpush2.bf16.msra.mxu0 0
        %517 = vmatprep.subr.bf16.mxu0 0
        %518 = vmatpush2.bf16.msra.mxu0 0
        %519 = vmatprep.subr.bf16.mxu0 0
        %520 = vmatpush2.bf16.msra.mxu0 0
        %521 = vmatprep.subr.bf16.mxu0 0
        %522 = vmatpush2.bf16.msra.mxu0 0
        %523 = vmatprep.mubr.bf16.mxu0 0
        %524 = vmatmul.mubr.bf16.gmra.mxu0 %v480
        %v525 = vpop.f32.mrf.mxu0
        %v526 = vadd.f32 0.0, %v525
        %v527 = vpop.f32.mrf.mxu0
        %v528 = vadd.f32 0.0, %v527
        %v529 = vpop.f32.mrf.mxu0
        %v530 = vpop.f32.mrf.mxu0
        %531 = vdwg.mxu0
        %532 = vmatprep.subr.bf16.mxu0 0
        %533 = vmatpush1.bf16.msra.mxu0 0
        %534 = vmatprep.subr.bf16.mxu0 0
        %535 = vmatpush1.bf16.msra.mxu0 0
        %536 = vmatprep.subr.bf16.mxu0 0
        %537 = vmatpush1.bf16.msra.mxu0 0
        %538 = vmatprep.subr.bf16.mxu0 0
        %539 = vmatpush1.bf16.msra.mxu0 0
        %540 = vmatprep.subr.bf16.mxu0 0
        %541 = vmatpush1.bf16.msra.mxu0 0
        %542 = vmatprep.subr.bf16.mxu0 0
        %543 = vmatpush1.bf16.msra.mxu0 0
        %544 = vmatprep.subr.bf16.mxu0 0
        %545 = vmatpush1.bf16.msra.mxu0 0
        %546 = vmatprep.subr.bf16.mxu0 0
        %547 = vmatpush1.bf16.msra.mxu0 %v489
        %548 = vmatprep.subr.bf16.mxu0 0
        %549 = vmatpush2.bf16.msra.mxu0 0
        %550 = vmatprep.subr.bf16.mxu0 0
        %551 = vmatpush2.bf16.msra.mxu0 0
        %552 = vmatprep.subr.bf16.mxu0 0
        %553 = vmatpush2.bf16.msra.mxu0 0
        %554 = vmatprep.subr.bf16.mxu0 0
        %555 = vmatpush2.bf16.msra.mxu0 0
        %556 = vmatprep.subr.bf16.mxu0 0
        %557 = vmatpush2.bf16.msra.mxu0 0
        %558 = vmatprep.subr.bf16.mxu0 0
        %559 = vmatpush2.bf16.msra.mxu0 0
        %560 = vmatprep.subr.bf16.mxu0 0
        %561 = vmatpush2.bf16.msra.mxu0 0
        %562 = vmatprep.subr.bf16.mxu0 0
        %563 = vmatpush2.bf16.msra.mxu0 0
        %564 = vmatprep.mubr.bf16.mxu0 0
        %565 = vmatmul.mubr.bf16.gmra.mxu0 %v480
        %v566 = vpop.f32.mrf.mxu0
        %v567 = vadd.f32 0.0, %v566
        %v568 = vpop.f32.mrf.mxu0
        %v569 = vpop.f32.mrf.mxu0
        %v570 = vpop.f32.mrf.mxu0
        %571 = vdwg.mxu0
        %v572 = vadd.f32 %v465, %v526
        %v573 = vadd.f32 %v466, %v528
        %v574 = vadd.f32 %v467, %v567
        %s575 = scalar_lea.vmem %s0, 16
        %v576 = vld [vmem:[%s575] sm:$0xf]
        %577 = vrot.lane.b32.xlu0 %v155, 109
        %v578 = vpop.permute.xlu0 %577
        %579 = vrot.lane.b32.xlu0 %v163, 109
        %v580 = vpop.permute.xlu0 %579
        %581 = vrot.lane.b32.xlu0 %v162, 109
        %v582 = vpop.permute.xlu0 %581
        %vm583 = vcmask 891904
        %v584 = vsel %vm583, %v578, %v580
        %v585 = vsel %vm583, %v580, %v582
        %v587 = vsel %vm173, %v576, 0
        %v590 = vsel %vm177, %v584, 0
        %v593 = vsel %vm177, %v585, 0
        %v596 = vsel %vm177, %v582, 0
        %598 = vmatprep.subr.bf16.mxu0 0
        %599 = vmatpush1.bf16.msra.mxu0 0
        %600 = vmatprep.subr.bf16.mxu0 0
        %601 = vmatpush1.bf16.msra.mxu0 0
        %602 = vmatprep.subr.bf16.mxu0 0
        %603 = vmatpush1.bf16.msra.mxu0 0
        %604 = vmatprep.subr.bf16.mxu0 0
        %605 = vmatpush1.bf16.msra.mxu0 0
        %606 = vmatprep.subr.bf16.mxu0 0
        %607 = vmatpush1.bf16.msra.mxu0 0
        %608 = vmatprep.subr.bf16.mxu0 0
        %609 = vmatpush1.bf16.msra.mxu0 0
        %610 = vmatprep.subr.bf16.mxu0 0
        %611 = vmatpush1.bf16.msra.mxu0 0
        %612 = vmatprep.subr.bf16.mxu0 %v593
        %613 = vmatpush1.bf16.msra.mxu0 %v590
        %614 = vmatprep.subr.bf16.mxu0 0
        %615 = vmatpush2.bf16.msra.mxu0 0
        %616 = vmatprep.subr.bf16.mxu0 0
        %617 = vmatpush2.bf16.msra.mxu0 0
        %618 = vmatprep.subr.bf16.mxu0 0
        %619 = vmatpush2.bf16.msra.mxu0 0
        %620 = vmatprep.subr.bf16.mxu0 0
        %621 = vmatpush2.bf16.msra.mxu0 0
        %622 = vmatprep.subr.bf16.mxu0 0
        %623 = vmatpush2.bf16.msra.mxu0 0
        %624 = vmatprep.subr.bf16.mxu0 0
        %625 = vmatpush2.bf16.msra.mxu0 0
        %626 = vmatprep.subr.bf16.mxu0 0
        %627 = vmatpush2.bf16.msra.mxu0 0
        %628 = vmatprep.subr.bf16.mxu0 0
        %629 = vmatpush2.bf16.msra.mxu0 0
        %630 = vmatprep.mubr.bf16.mxu0 0
        %631 = vmatmul.mubr.bf16.gmra.mxu0 %v587
        %v632 = vpop.f32.mrf.mxu0
        %v633 = vadd.f32 0.0, %v632
        %v634 = vpop.f32.mrf.mxu0
        %v635 = vadd.f32 0.0, %v634
        %v636 = vpop.f32.mrf.mxu0
        %v637 = vpop.f32.mrf.mxu0
        %638 = vdwg.mxu0
        %639 = vmatprep.subr.bf16.mxu0 0
        %640 = vmatpush1.bf16.msra.mxu0 0
        %641 = vmatprep.subr.bf16.mxu0 0
        %642 = vmatpush1.bf16.msra.mxu0 0
        %643 = vmatprep.subr.bf16.mxu0 0
        %644 = vmatpush1.bf16.msra.mxu0 0
        %645 = vmatprep.subr.bf16.mxu0 0
        %646 = vmatpush1.bf16.msra.mxu0 0
        %647 = vmatprep.subr.bf16.mxu0 0
        %648 = vmatpush1.bf16.msra.mxu0 0
        %649 = vmatprep.subr.bf16.mxu0 0
        %650 = vmatpush1.bf16.msra.mxu0 0
        %651 = vmatprep.subr.bf16.mxu0 0
        %652 = vmatpush1.bf16.msra.mxu0 0
        %653 = vmatprep.subr.bf16.mxu0 0
        %654 = vmatpush1.bf16.msra.mxu0 %v596
        %655 = vmatprep.subr.bf16.mxu0 0
        %656 = vmatpush2.bf16.msra.mxu0 0
        %657 = vmatprep.subr.bf16.mxu0 0
        %658 = vmatpush2.bf16.msra.mxu0 0
        %659 = vmatprep.subr.bf16.mxu0 0
        %660 = vmatpush2.bf16.msra.mxu0 0
        %661 = vmatprep.subr.bf16.mxu0 0
        %662 = vmatpush2.bf16.msra.mxu0 0
        %663 = vmatprep.subr.bf16.mxu0 0
        %664 = vmatpush2.bf16.msra.mxu0 0
        %665 = vmatprep.subr.bf16.mxu0 0
        %666 = vmatpush2.bf16.msra.mxu0 0
        %667 = vmatprep.subr.bf16.mxu0 0
        %668 = vmatpush2.bf16.msra.mxu0 0
        %669 = vmatprep.subr.bf16.mxu0 0
        %670 = vmatpush2.bf16.msra.mxu0 0
        %671 = vmatprep.mubr.bf16.mxu0 0
        %672 = vmatmul.mubr.bf16.gmra.mxu0 %v587
        %v673 = vpop.f32.mrf.mxu0
        %v674 = vadd.f32 0.0, %v673
        %v675 = vpop.f32.mrf.mxu0
        %v676 = vpop.f32.mrf.mxu0
        %v677 = vpop.f32.mrf.mxu0
        %678 = vdwg.mxu0
        %v679 = vadd.f32 %v572, %v633
        %v680 = vadd.f32 %v573, %v635
        %v681 = vadd.f32 %v574, %v674
        %s682 = scalar_lea.vmem %s0, 20
        %v683 = vld [vmem:[%s682] sm:$0xf]
        %684 = vrot.lane.b32.xlu0 %v155, 108
        %v685 = vpop.permute.xlu0 %684
        %686 = vrot.lane.b32.xlu0 %v163, 108
        %v687 = vpop.permute.xlu0 %686
        %688 = vrot.lane.b32.xlu0 %v162, 108
        %v689 = vpop.permute.xlu0 %688
        %vm690 = vcmask 883712
        %v691 = vsel %vm690, %v685, %v687
        %v692 = vsel %vm690, %v687, %v689
        %v694 = vsel %vm173, %v683, 0
        %v697 = vsel %vm177, %v691, 0
        %v700 = vsel %vm177, %v692, 0
        %v703 = vsel %vm177, %v689, 0
        %705 = vmatprep.subr.bf16.mxu0 0
        %706 = vmatpush1.bf16.msra.mxu0 0
        %707 = vmatprep.subr.bf16.mxu0 0
        %708 = vmatpush1.bf16.msra.mxu0 0
        %709 = vmatprep.subr.bf16.mxu0 0
        %710 = vmatpush1.bf16.msra.mxu0 0
        %711 = vmatprep.subr.bf16.mxu0 0
        %712 = vmatpush1.bf16.msra.mxu0 0
        %713 = vmatprep.subr.bf16.mxu0 0
        %714 = vmatpush1.bf16.msra.mxu0 0
        %715 = vmatprep.subr.bf16.mxu0 0
        %716 = vmatpush1.bf16.msra.mxu0 0
        %717 = vmatprep.subr.bf16.mxu0 0
        %718 = vmatpush1.bf16.msra.mxu0 0
        %719 = vmatprep.subr.bf16.mxu0 %v700
        %720 = vmatpush1.bf16.msra.mxu0 %v697
        %721 = vmatprep.subr.bf16.mxu0 0
        %722 = vmatpush2.bf16.msra.mxu0 0
        %723 = vmatprep.subr.bf16.mxu0 0
        %724 = vmatpush2.bf16.msra.mxu0 0
        %725 = vmatprep.subr.bf16.mxu0 0
        %726 = vmatpush2.bf16.msra.mxu0 0
        %727 = vmatprep.subr.bf16.mxu0 0
        %728 = vmatpush2.bf16.msra.mxu0 0
        %729 = vmatprep.subr.bf16.mxu0 0
        %730 = vmatpush2.bf16.msra.mxu0 0
        %731 = vmatprep.subr.bf16.mxu0 0
        %732 = vmatpush2.bf16.msra.mxu0 0
        %733 = vmatprep.subr.bf16.mxu0 0
        %734 = vmatpush2.bf16.msra.mxu0 0
        %735 = vmatprep.subr.bf16.mxu0 0
        %736 = vmatpush2.bf16.msra.mxu0 0
        %737 = vmatprep.mubr.bf16.mxu0 0
        %738 = vmatmul.mubr.bf16.gmra.mxu0 %v694
        %v739 = vpop.f32.mrf.mxu0
        %v740 = vadd.f32 0.0, %v739
        %v741 = vpop.f32.mrf.mxu0
        %v742 = vadd.f32 0.0, %v741
        %v743 = vpop.f32.mrf.mxu0
        %v744 = vpop.f32.mrf.mxu0
        %745 = vdwg.mxu0
        %746 = vmatprep.subr.bf16.mxu0 0
        %747 = vmatpush1.bf16.msra.mxu0 0
        %748 = vmatprep.subr.bf16.mxu0 0
        %749 = vmatpush1.bf16.msra.mxu0 0
        %750 = vmatprep.subr.bf16.mxu0 0
        %751 = vmatpush1.bf16.msra.mxu0 0
        %752 = vmatprep.subr.bf16.mxu0 0
        %753 = vmatpush1.bf16.msra.mxu0 0
        %754 = vmatprep.subr.bf16.mxu0 0
        %755 = vmatpush1.bf16.msra.mxu0 0
        %756 = vmatprep.subr.bf16.mxu0 0
        %757 = vmatpush1.bf16.msra.mxu0 0
        %758 = vmatprep.subr.bf16.mxu0 0
        %759 = vmatpush1.bf16.msra.mxu0 0
        %760 = vmatprep.subr.bf16.mxu0 0
        %761 = vmatpush1.bf16.msra.mxu0 %v703
        %762 = vmatprep.subr.bf16.mxu0 0
        %763 = vmatpush2.bf16.msra.mxu0 0
        %764 = vmatprep.subr.bf16.mxu0 0
        %765 = vmatpush2.bf16.msra.mxu0 0
        %766 = vmatprep.subr.bf16.mxu0 0
        %767 = vmatpush2.bf16.msra.mxu0 0
        %768 = vmatprep.subr.bf16.mxu0 0
        %769 = vmatpush2.bf16.msra.mxu0 0
        %770 = vmatprep.subr.bf16.mxu0 0
        %771 = vmatpush2.bf16.msra.mxu0 0
        %772 = vmatprep.subr.bf16.mxu0 0
        %773 = vmatpush2.bf16.msra.mxu0 0
        %774 = vmatprep.subr.bf16.mxu0 0
        %775 = vmatpush2.bf16.msra.mxu0 0
        %776 = vmatprep.subr.bf16.mxu0 0
        %777 = vmatpush2.bf16.msra.mxu0 0
        %778 = vmatprep.mubr.bf16.mxu0 0
        %779 = vmatmul.mubr.bf16.gmra.mxu0 %v694
        %v780 = vpop.f32.mrf.mxu0
        %v781 = vadd.f32 0.0, %v780
        %v782 = vpop.f32.mrf.mxu0
        %v783 = vpop.f32.mrf.mxu0
        %v784 = vpop.f32.mrf.mxu0
        %785 = vdwg.mxu0
        %v786 = vadd.f32 %v679, %v740
        %v787 = vadd.f32 %v680, %v742
        %v788 = vadd.f32 %v681, %v781
        %s789 = scalar_lea.vmem %s0, 24
        %v790 = vld [vmem:[%s789] sm:$0xf]
        %791 = vrot.lane.b32.xlu0 %v155, 92
        %v792 = vpop.permute.xlu0 %791
        %793 = vrot.lane.b32.xlu0 %v163, 92
        %v794 = vpop.permute.xlu0 %793
        %795 = vrot.lane.b32.xlu0 %v162, 92
        %v796 = vpop.permute.xlu0 %795
        %vm797 = vcmask 752640
        %v798 = vsel %vm797, %v792, %v794
        %v799 = vsel %vm797, %v794, %v796
        %v801 = vsel %vm173, %v790, 0
        %v804 = vsel %vm177, %v798, 0
        %v807 = vsel %vm177, %v799, 0
        %v810 = vsel %vm177, %v796, 0
        %812 = vmatprep.subr.bf16.mxu0 0
        %813 = vmatpush1.bf16.msra.mxu0 0
        %814 = vmatprep.subr.bf16.mxu0 0
        %815 = vmatpush1.bf16.msra.mxu0 0
        %816 = vmatprep.subr.bf16.mxu0 0
        %817 = vmatpush1.bf16.msra.mxu0 0
        %818 = vmatprep.subr.bf16.mxu0 0
        %819 = vmatpush1.bf16.msra.mxu0 0
        %820 = vmatprep.subr.bf16.mxu0 0
        %821 = vmatpush1.bf16.msra.mxu0 0
        %822 = vmatprep.subr.bf16.mxu0 0
        %823 = vmatpush1.bf16.msra.mxu0 0
        %824 = vmatprep.subr.bf16.mxu0 0
        %825 = vmatpush1.bf16.msra.mxu0 0
        %826 = vmatprep.subr.bf16.mxu0 %v807
        %827 = vmatpush1.bf16.msra.mxu0 %v804
        %828 = vmatprep.subr.bf16.mxu0 0
        %829 = vmatpush2.bf16.msra.mxu0 0
        %830 = vmatprep.subr.bf16.mxu0 0
        %831 = vmatpush2.bf16.msra.mxu0 0
        %832 = vmatprep.subr.bf16.mxu0 0
        %833 = vmatpush2.bf16.msra.mxu0 0
        %834 = vmatprep.subr.bf16.mxu0 0
        %835 = vmatpush2.bf16.msra.mxu0 0
        %836 = vmatprep.subr.bf16.mxu0 0
        %837 = vmatpush2.bf16.msra.mxu0 0
        %838 = vmatprep.subr.bf16.mxu0 0
        %839 = vmatpush2.bf16.msra.mxu0 0
        %840 = vmatprep.subr.bf16.mxu0 0
        %841 = vmatpush2.bf16.msra.mxu0 0
        %842 = vmatprep.subr.bf16.mxu0 0
        %843 = vmatpush2.bf16.msra.mxu0 0
        %844 = vmatprep.mubr.bf16.mxu0 0
        %845 = vmatmul.mubr.bf16.gmra.mxu0 %v801
        %v846 = vpop.f32.mrf.mxu0
        %v847 = vadd.f32 0.0, %v846
        %v848 = vpop.f32.mrf.mxu0
        %v849 = vadd.f32 0.0, %v848
        %v850 = vpop.f32.mrf.mxu0
        %v851 = vpop.f32.mrf.mxu0
        %852 = vdwg.mxu0
        %853 = vmatprep.subr.bf16.mxu0 0
        %854 = vmatpush1.bf16.msra.mxu0 0
        %855 = vmatprep.subr.bf16.mxu0 0
        %856 = vmatpush1.bf16.msra.mxu0 0
        %857 = vmatprep.subr.bf16.mxu0 0
        %858 = vmatpush1.bf16.msra.mxu0 0
        %859 = vmatprep.subr.bf16.mxu0 0
        %860 = vmatpush1.bf16.msra.mxu0 0
        %861 = vmatprep.subr.bf16.mxu0 0
        %862 = vmatpush1.bf16.msra.mxu0 0
        %863 = vmatprep.subr.bf16.mxu0 0
        %864 = vmatpush1.bf16.msra.mxu0 0
        %865 = vmatprep.subr.bf16.mxu0 0
        %866 = vmatpush1.bf16.msra.mxu0 0
        %867 = vmatprep.subr.bf16.mxu0 0
        %868 = vmatpush1.bf16.msra.mxu0 %v810
        %869 = vmatprep.subr.bf16.mxu0 0
        %870 = vmatpush2.bf16.msra.mxu0 0
        %871 = vmatprep.subr.bf16.mxu0 0
        %872 = vmatpush2.bf16.msra.mxu0 0
        %873 = vmatprep.subr.bf16.mxu0 0
        %874 = vmatpush2.bf16.msra.mxu0 0
        %875 = vmatprep.subr.bf16.mxu0 0
        %876 = vmatpush2.bf16.msra.mxu0 0
        %877 = vmatprep.subr.bf16.mxu0 0
        %878 = vmatpush2.bf16.msra.mxu0 0
        %879 = vmatprep.subr.bf16.mxu0 0
        %880 = vmatpush2.bf16.msra.mxu0 0
        %881 = vmatprep.subr.bf16.mxu0 0
        %882 = vmatpush2.bf16.msra.mxu0 0
        %883 = vmatprep.subr.bf16.mxu0 0
        %884 = vmatpush2.bf16.msra.mxu0 0
        %885 = vmatprep.mubr.bf16.mxu0 0
        %886 = vmatmul.mubr.bf16.gmra.mxu0 %v801
        %v887 = vpop.f32.mrf.mxu0
        %v888 = vadd.f32 0.0, %v887
        %v889 = vpop.f32.mrf.mxu0
        %v890 = vpop.f32.mrf.mxu0
        %v891 = vpop.f32.mrf.mxu0
        %892 = vdwg.mxu0
        %v893 = vadd.f32 %v786, %v847
        %v894 = vadd.f32 %v787, %v849
        %v895 = vadd.f32 %v788, %v888
        %s896 = scalar_lea.vmem %s0, 28
        %v897 = vld [vmem:[%s896] sm:$0xf]
        %898 = vrot.lane.b32.xlu0 %v155, 91
        %v899 = vpop.permute.xlu0 %898
        %900 = vrot.lane.b32.xlu0 %v163, 91
        %v901 = vpop.permute.xlu0 %900
        %902 = vrot.lane.b32.xlu0 %v162, 91
        %v903 = vpop.permute.xlu0 %902
        %vm904 = vcmask 744448
        %v905 = vsel %vm904, %v899, %v901
        %v906 = vsel %vm904, %v901, %v903
        %v908 = vsel %vm173, %v897, 0
        %v911 = vsel %vm177, %v905, 0
        %v914 = vsel %vm177, %v906, 0
        %v917 = vsel %vm177, %v903, 0
        %919 = vmatprep.subr.bf16.mxu0 0
        %920 = vmatpush1.bf16.msra.mxu0 0
        %921 = vmatprep.subr.bf16.mxu0 0
        %922 = vmatpush1.bf16.msra.mxu0 0
        %923 = vmatprep.subr.bf16.mxu0 0
        %924 = vmatpush1.bf16.msra.mxu0 0
        %925 = vmatprep.subr.bf16.mxu0 0
        %926 = vmatpush1.bf16.msra.mxu0 0
        %927 = vmatprep.subr.bf16.mxu0 0
        %928 = vmatpush1.bf16.msra.mxu0 0
        %929 = vmatprep.subr.bf16.mxu0 0
        %930 = vmatpush1.bf16.msra.mxu0 0
        %931 = vmatprep.subr.bf16.mxu0 0
        %932 = vmatpush1.bf16.msra.mxu0 0
        %933 = vmatprep.subr.bf16.mxu0 %v914
        %934 = vmatpush1.bf16.msra.mxu0 %v911
        %935 = vmatprep.subr.bf16.mxu0 0
        %936 = vmatpush2.bf16.msra.mxu0 0
        %937 = vmatprep.subr.bf16.mxu0 0
        %938 = vmatpush2.bf16.msra.mxu0 0
        %939 = vmatprep.subr.bf16.mxu0 0
        %940 = vmatpush2.bf16.msra.mxu0 0
        %941 = vmatprep.subr.bf16.mxu0 0
        %942 = vmatpush2.bf16.msra.mxu0 0
        %943 = vmatprep.subr.bf16.mxu0 0
        %944 = vmatpush2.bf16.msra.mxu0 0
        %945 = vmatprep.subr.bf16.mxu0 0
        %946 = vmatpush2.bf16.msra.mxu0 0
        %947 = vmatprep.subr.bf16.mxu0 0
        %948 = vmatpush2.bf16.msra.mxu0 0
        %949 = vmatprep.subr.bf16.mxu0 0
        %950 = vmatpush2.bf16.msra.mxu0 0
        %951 = vmatprep.mubr.bf16.mxu0 0
        %952 = vmatmul.mubr.bf16.gmra.mxu0 %v908
        %v953 = vpop.f32.mrf.mxu0
        %v954 = vadd.f32 0.0, %v953
        %v955 = vpop.f32.mrf.mxu0
        %v956 = vadd.f32 0.0, %v955
        %v957 = vpop.f32.mrf.mxu0
        %v958 = vpop.f32.mrf.mxu0
        %959 = vdwg.mxu0
        %960 = vmatprep.subr.bf16.mxu0 0
        %961 = vmatpush1.bf16.msra.mxu0 0
        %962 = vmatprep.subr.bf16.mxu0 0
        %963 = vmatpush1.bf16.msra.mxu0 0
        %964 = vmatprep.subr.bf16.mxu0 0
        %965 = vmatpush1.bf16.msra.mxu0 0
        %966 = vmatprep.subr.bf16.mxu0 0
        %967 = vmatpush1.bf16.msra.mxu0 0
        %968 = vmatprep.subr.bf16.mxu0 0
        %969 = vmatpush1.bf16.msra.mxu0 0
        %970 = vmatprep.subr.bf16.mxu0 0
        %971 = vmatpush1.bf16.msra.mxu0 0
        %972 = vmatprep.subr.bf16.mxu0 0
        %973 = vmatpush1.bf16.msra.mxu0 0
        %974 = vmatprep.subr.bf16.mxu0 0
        %975 = vmatpush1.bf16.msra.mxu0 %v917
        %976 = vmatprep.subr.bf16.mxu0 0
        %977 = vmatpush2.bf16.msra.mxu0 0
        %978 = vmatprep.subr.bf16.mxu0 0
        %979 = vmatpush2.bf16.msra.mxu0 0
        %980 = vmatprep.subr.bf16.mxu0 0
        %981 = vmatpush2.bf16.msra.mxu0 0
        %982 = vmatprep.subr.bf16.mxu0 0
        %983 = vmatpush2.bf16.msra.mxu0 0
        %984 = vmatprep.subr.bf16.mxu0 0
        %985 = vmatpush2.bf16.msra.mxu0 0
        %986 = vmatprep.subr.bf16.mxu0 0
        %987 = vmatpush2.bf16.msra.mxu0 0
        %988 = vmatprep.subr.bf16.mxu0 0
        %989 = vmatpush2.bf16.msra.mxu0 0
        %990 = vmatprep.subr.bf16.mxu0 0
        %991 = vmatpush2.bf16.msra.mxu0 0
        %992 = vmatprep.mubr.bf16.mxu0 0
        %993 = vmatmul.mubr.bf16.gmra.mxu0 %v908
        %v994 = vpop.f32.mrf.mxu0
        %v995 = vadd.f32 0.0, %v994
        %v996 = vpop.f32.mrf.mxu0
        %v997 = vpop.f32.mrf.mxu0
        %v998 = vpop.f32.mrf.mxu0
        %999 = vdwg.mxu0
        %v1000 = vadd.f32 %v893, %v954
        %v1001 = vadd.f32 %v894, %v956
        %v1002 = vadd.f32 %v895, %v995
        %s1003 = scalar_lea.vmem %s0, 32
        %v1004 = vld [vmem:[%s1003] sm:$0xf]
        %1005 = vrot.lane.b32.xlu0 %v155, 90
        %v1006 = vpop.permute.xlu0 %1005
        %1007 = vrot.lane.b32.xlu0 %v163, 90
        %v1008 = vpop.permute.xlu0 %1007
        %1009 = vrot.lane.b32.xlu0 %v162, 90
        %v1010 = vpop.permute.xlu0 %1009
        %vm1011 = vcmask 736256
        %v1012 = vsel %vm1011, %v1006, %v1008
        %v1013 = vsel %vm1011, %v1008, %v1010
        %v1015 = vsel %vm173, %v1004, 0
        %v1018 = vsel %vm177, %v1012, 0
        %v1021 = vsel %vm177, %v1013, 0
        %v1024 = vsel %vm177, %v1010, 0
        %1026 = vmatprep.subr.bf16.mxu0 0
        %1027 = vmatpush1.bf16.msra.mxu0 0
        %1028 = vmatprep.subr.bf16.mxu0 0
        %1029 = vmatpush1.bf16.msra.mxu0 0
        %1030 = vmatprep.subr.bf16.mxu0 0
        %1031 = vmatpush1.bf16.msra.mxu0 0
        %1032 = vmatprep.subr.bf16.mxu0 0
        %1033 = vmatpush1.bf16.msra.mxu0 0
        %1034 = vmatprep.subr.bf16.mxu0 0
        %1035 = vmatpush1.bf16.msra.mxu0 0
        %1036 = vmatprep.subr.bf16.mxu0 0
        %1037 = vmatpush1.bf16.msra.mxu0 0
        %1038 = vmatprep.subr.bf16.mxu0 0
        %1039 = vmatpush1.bf16.msra.mxu0 0
        %1040 = vmatprep.subr.bf16.mxu0 %v1021
        %1041 = vmatpush1.bf16.msra.mxu0 %v1018
        %1042 = vmatprep.subr.bf16.mxu0 0
        %1043 = vmatpush2.bf16.msra.mxu0 0
        %1044 = vmatprep.subr.bf16.mxu0 0
        %1045 = vmatpush2.bf16.msra.mxu0 0
        %1046 = vmatprep.subr.bf16.mxu0 0
        %1047 = vmatpush2.bf16.msra.mxu0 0
        %1048 = vmatprep.subr.bf16.mxu0 0
        %1049 = vmatpush2.bf16.msra.mxu0 0
        %1050 = vmatprep.subr.bf16.mxu0 0
        %1051 = vmatpush2.bf16.msra.mxu0 0
        %1052 = vmatprep.subr.bf16.mxu0 0
        %1053 = vmatpush2.bf16.msra.mxu0 0
        %1054 = vmatprep.subr.bf16.mxu0 0
        %1055 = vmatpush2.bf16.msra.mxu0 0
        %1056 = vmatprep.subr.bf16.mxu0 0
        %1057 = vmatpush2.bf16.msra.mxu0 0
        %1058 = vmatprep.mubr.bf16.mxu0 0
        %1059 = vmatmul.mubr.bf16.gmra.mxu0 %v1015
        %v1060 = vpop.f32.mrf.mxu0
        %v1061 = vadd.f32 0.0, %v1060
        %v1062 = vpop.f32.mrf.mxu0
        %v1063 = vadd.f32 0.0, %v1062
        %v1064 = vpop.f32.mrf.mxu0
        %v1065 = vpop.f32.mrf.mxu0
        %1066 = vdwg.mxu0
        %1067 = vmatprep.subr.bf16.mxu0 0
        %1068 = vmatpush1.bf16.msra.mxu0 0
        %1069 = vmatprep.subr.bf16.mxu0 0
        %1070 = vmatpush1.bf16.msra.mxu0 0
        %1071 = vmatprep.subr.bf16.mxu0 0
        %1072 = vmatpush1.bf16.msra.mxu0 0
        %1073 = vmatprep.subr.bf16.mxu0 0
        %1074 = vmatpush1.bf16.msra.mxu0 0
        %1075 = vmatprep.subr.bf16.mxu0 0
        %1076 = vmatpush1.bf16.msra.mxu0 0
        %1077 = vmatprep.subr.bf16.mxu0 0
        %1078 = vmatpush1.bf16.msra.mxu0 0
        %1079 = vmatprep.subr.bf16.mxu0 0
        %1080 = vmatpush1.bf16.msra.mxu0 0
        %1081 = vmatprep.subr.bf16.mxu0 0
        %1082 = vmatpush1.bf16.msra.mxu0 %v1024
        %1083 = vmatprep.subr.bf16.mxu0 0
        %1084 = vmatpush2.bf16.msra.mxu0 0
        %1085 = vmatprep.subr.bf16.mxu0 0
        %1086 = vmatpush2.bf16.msra.mxu0 0
        %1087 = vmatprep.subr.bf16.mxu0 0
        %1088 = vmatpush2.bf16.msra.mxu0 0
        %1089 = vmatprep.subr.bf16.mxu0 0
        %1090 = vmatpush2.bf16.msra.mxu0 0
        %1091 = vmatprep.subr.bf16.mxu0 0
        %1092 = vmatpush2.bf16.msra.mxu0 0
        %1093 = vmatprep.subr.bf16.mxu0 0
        %1094 = vmatpush2.bf16.msra.mxu0 0
        %1095 = vmatprep.subr.bf16.mxu0 0
        %1096 = vmatpush2.bf16.msra.mxu0 0
        %1097 = vmatprep.subr.bf16.mxu0 0
        %1098 = vmatpush2.bf16.msra.mxu0 0
        %1099 = vmatprep.mubr.bf16.mxu0 0
        %1100 = vmatmul.mubr.bf16.gmra.mxu0 %v1015
        %v1101 = vpop.f32.mrf.mxu0
        %v1102 = vadd.f32 0.0, %v1101
        %v1103 = vpop.f32.mrf.mxu0
        %v1104 = vpop.f32.mrf.mxu0
        %v1105 = vpop.f32.mrf.mxu0
        %1106 = vdwg.mxu0
        %v1107 = vadd.f32 %v1000, %v1061
        %v1108 = vadd.f32 %v1001, %v1063
        %v1109 = vadd.f32 %v1002, %v1102
        %v1110 = vmax.f32 %v1107, 0.0
        %v1111 = vmax.f32 %v1108, 0.0
        %v1112 = vmax.f32 %v1109, 0.0
        %1113 = vst [vmem:[%s136] sm:$0xff] %v1110
        %1114 = vst [vmem:[%s136 + $0x8] sm:$0xff] %v1111
        %vm1115 = vcmask 261120
        %1116 = vst.msk [vmem:[%s136 + $0x10] sm:$0xff] %vm1115, %v1112
        %s1117 = sand.u32 %s71, 1
        %s1118 = scalar_lea.sflag [#allocation3], %s1117
        %s1119 = sand.u32 %s71, 1
        %s1120 = smul.addr %s1119, 24
        %s1121 = scalar_lea.vmem [#allocation2], %s1120
        // Predicated region
        $region29: #{tpu_custom_call.1} parent=27 // pred_check
          %p1122 = pneg %p81
        $region30: #{tpu_custom_call.1} parent=27 // pred_check_branch
          %1124 = sbr.rel (%p1122) target = $region32
        $region31: #{tpu_custom_call.1} parent=27 // pred_region
          %s1126 = ssub.s32 384, 384
          %1127 = vsyncadd %s1118, %s1126
          %s1128 = smul.addr %s16, 3
          %s1129 = smul.addr %s1128, 128
          %s1130 = scalar_lea.hbm %s2, %s1129
          %s1132 = sshll.u32 %s1121, 4
          %s1133 = int_to_ptr.vmem [resolvable:$true] %s1132
          %1135 = dma.vmem_to_hbm [thread:$0]  %s1133, 384, %s1130, %s1118
        $region32: #{tpu_custom_call.1} parent=27 // pred_fallthru
          _
      $region28: #{tpu_custom_call.1} parent=5 // pred_fallthru
        _
      %p1136 = scmp.le.s32.totalorder 2, %s11
      // Predicated region
      $region33: #{tpu_custom_call.1} parent=5 // pred_check
        %p1137 = pneg %p1136
      $region34: #{tpu_custom_call.1} parent=5 // pred_check_branch
        %1139 = sbr.rel (%p1137) target = $region36
      $region35: #{tpu_custom_call.1} parent=5 // pred_region
        %s1140 = ssub.s32 %s11, 2
        // Predicated region
        $region37: #{tpu_custom_call.1} parent=35 // pred_check
          %p1141 = pneg %p87
        $region38: #{tpu_custom_call.1} parent=35 // pred_check_branch
          %1143 = sbr.rel (%p1141) target = $region40
        $region39: #{tpu_custom_call.1} parent=35 // pred_region
          %s1144 = sand.u32 %s72, 1
          %s1145 = scalar_lea.sflag [#allocation3], %s1144
          %s1146 = sand.u32 %s72, 1
          %s1147 = smul.addr %s1146, 24
          %s1148 = scalar_lea.vmem [#allocation2], %s1147
          %1149 = dma.done %s1145, 384
        $region40: #{tpu_custom_call.1} parent=35 // pred_fallthru
          _
      $region36: #{tpu_custom_call.1} parent=5 // pred_fallthru
        _
    $region6: #{tpu_custom_call.1} parent=1 // loop_footer
      %s15 = sadd.s32 1, %s11
    $region7: #{tpu_custom_call.1} parent=1 // loop_footer_branch
      %10 = sbr.rel target = $region3
    $region8: #{tpu_custom_call.1} parent=1 // loop_exit
      _
    %1150 = vsyncpa [#allocation3], 1
    %s1151 = scalar_lea.sflag [#allocation3], 1
    %1152 = vsyncpa %s1151, 1

</llo_original>
